<compile_context>
chip_gen: v7x
topology: tpu7x:2x2x1
jax: 0.10.0
libtpu: 0.0.40
codegen_flags: <defaults>
</compile_context>

<pallas_src>
import functools

import jax
import jax.numpy as jnp
from jax.experimental import pallas as pl
from jax.experimental.pallas import tpu as pltpu


def _copy_kernel(x_ref, o_ref):
    # Pure pass-through of the current VMEM tile.
    o_ref[...] = x_ref[...]


# Per-buffer block target (input + output, double-buffered => ~4x this live).
_TARGET_BLOCK_BYTES = 4 * 1024 * 1024
# Explicit scoped-VMEM limit: well above our ~16 MiB working set, with headroom
# below every chip's physical VMEM (v5e/v6e: 128 MiB, v7x: 64 MiB).
_VMEM_LIMIT_BYTES = 48 * 1024 * 1024

# Sublane packing per element byte-width (f32 -> 8, bf16 -> 16, int8/fp8 -> 32).
_SUBLANE = {4: 8, 2: 16, 1: 32}


def identity(x: jax.Array) -> jax.Array:
    """nn.Identity.forward: return x unchanged (no kernel, zero HBM traffic)."""
    return x


def _copy_2d(x2d, rows, width, itemsize, alias, cost):
    """Tiled Pallas copy of a (rows, width) slab, last dim always full extent."""
    sub = _SUBLANE.get(itemsize, 8)
    budget_rows = max(sub, (_TARGET_BLOCK_BYTES // (width * itemsize)) // sub * sub)
    if rows <= budget_rows:
        block_rows = rows            # full extent: (8,128)/full-extent rule satisfied
        grid = (1,)
    else:
        block_rows = budget_rows     # sublane multiple; Pallas masks the partial tail
        grid = (pl.cdiv(rows, block_rows),)

    return pl.pallas_call(
        _copy_kernel,
        out_shape=jax.ShapeDtypeStruct((rows, width), x2d.dtype),
        grid_spec=pltpu.PrefetchScalarGridSpec(
            num_scalar_prefetch=0,
            grid=grid,
            in_specs=[pl.BlockSpec((block_rows, width), lambda i: (i, 0))],
            out_specs=pl.BlockSpec((block_rows, width), lambda i: (i, 0)),
        ),
        input_output_aliases={0: 0} if alias else {},
        cost_estimate=cost,
        compiler_params=pltpu.CompilerParams(
            # TODO(synk): on v7x, pltpu.CORE_PARALLEL here would shard the copy
            # grid across both TensorCores; kept as "parallel" for portability.
            dimension_semantics=("parallel",),
            vmem_limit_bytes=_VMEM_LIMIT_BYTES,
        ),
    )(x2d)


@functools.partial(jax.jit, static_argnames=("donated",))
def identity_copy(x: jax.Array, *, donated: bool = False) -> jax.Array:
    """Identity as a materializing Pallas copy kernel.

    Set donated=True only if the caller actually donates x (e.g. via
    jax.jit donate_argnums); then the output aliases the input buffer and the
    copy is effectively free. Without donation, aliasing is disabled so XLA
    does not insert a defensive operand copy (which would double HBM traffic).
    """
    orig_shape = x.shape
    n = x.size
    itemsize = jnp.dtype(x.dtype).itemsize
    cost = pl.CostEstimate(flops=0, transcendentals=0, bytes_accessed=2 * n * itemsize)

    if x.ndim == 0:
        # Scalar: trivial (1,1) tile.
        return _copy_2d(x.reshape(1, 1), 1, 1, itemsize, donated, cost).reshape(orig_shape)

    # Preferred path: widest lane-dense width (multiple of 128) dividing n
    # exactly, so the reshapes are free and stores are full-width vst.
    width = None
    for w in (1024, 512, 256, 128):
        if n % w == 0:
            width = w
            break

    if width is not None:
        rows = n // width
        out2d = _copy_2d(x.reshape(rows, width), rows, width, itemsize, donated, cost)
        return out2d.reshape(orig_shape)

    # Unaligned total size: collapse to (leading, last_dim) and tile the
    # leading axis; last dim at full extent keeps the (8,128)/full-extent rule
    # satisfied and Pallas edge-masks the tail block.
    if x.ndim >= 2:
        width = orig_shape[-1]
        rows = n // width
    else:
        width = n
        rows = 1
    # TODO(synk): a single row wider than the per-buffer VMEM budget (unaligned
    # last dim of many MiB) would need an additional lane-tiled masked path.
    out2d = _copy_2d(x.reshape(rows, width), rows, width, itemsize, donated, cost)
    return out2d.reshape(orig_shape)


if __name__ == "__main__":
    key = jax.random.PRNGKey(0)
    # Small NCHW input consistent with a conv-style module input.
    x = jax.random.normal(key, (2, 4, 16, 16), dtype=jnp.float32)
    x_host = jax.device_get(x)  # host snapshot for verification

    # True identity (module semantics): no kernel launched.
    y0 = identity(x)
    assert y0.shape == x_host.shape and y0.dtype == x_host.dtype

    # Pallas copy kernel (materialized identity), no donation -> no aliasing.
    y = jax.block_until_ready(identity_copy(x))
    assert y.shape == x_host.shape, (y.shape, x_host.shape)
    assert y.dtype == x_host.dtype, (y.dtype, x_host.dtype)
    assert bool((jax.device_get(y) == x_host).all()), "Identity kernel output mismatch"

    # Exercise the unaligned (n % 128 != 0) fallback path as well.
    x_odd = jax.random.normal(jax.random.PRNGKey(0), (3, 5, 7), dtype=jnp.float32)
    y_odd = jax.block_until_ready(identity_copy(x_odd))
    assert bool((jax.device_get(y_odd) == jax.device_get(x_odd)).all()), "Fallback path mismatch"

    print("KERNEL_OK")
</pallas_src>

<mosaic_0001>
module attributes {stable_mosaic.version = 11 : i64} {
  func.func @_copy_kernel(%arg0: i32, %arg1: memref<2x1024xf32, #tpu.memory_space<vmem>>, %arg2: memref<2x1024xf32, #tpu.memory_space<vmem>>) attributes {dimension_semantics = [#tpu.dimension_semantics<parallel>], iteration_bounds = array<i64: 1>, scalar_prefetch = 0 : i64, scratch_operands = 0 : i64, tpu.core_type = #tpu.core_type<tc>, window_params = [{transform_indices = @transform_0, window_bounds = array<i64: 2, 1024>}, {transform_indices = @transform_1, window_bounds = array<i64: 2, 1024>}]} {
    %c0 = arith.constant 0 : index
    %c0_0 = arith.constant 0 : index
    %0 = vector.load %arg1[%c0, %c0_0] : memref<2x1024xf32, #tpu.memory_space<vmem>>, vector<2x1024xf32>
    %c0_1 = arith.constant 0 : index
    %c0_2 = arith.constant 0 : index
    %1 = vector.load %arg2[%c0_1, %c0_2] : memref<2x1024xf32, #tpu.memory_space<vmem>>, vector<2x1024xf32>
    tpu.vector_store %arg2[%c0_1, %c0_2], %0 {strides = array<i32>} : memref<2x1024xf32, #tpu.memory_space<vmem>>, vector<2x1024xf32>,
    return
  }
  func.func @transform_0(%arg0: i32) -> (i32, i32) {
    %c0_i32 = arith.constant 0 : i32
    %c0_i32_0 = arith.constant 0 : i32
    return %arg0, %c0_i32 : i32, i32
  }
  func.func @transform_1(%arg0: i32) -> (i32, i32) {
    %c0_i32 = arith.constant 0 : i32
    %c0_i32_0 = arith.constant 0 : i32
    return %arg0, %c0_i32 : i32, i32
  }
}

</mosaic_0001>

<llo_original>
// kernel: identity_copy.1
$region0: #{identity_copy.1}
  #allocation0 [shape = 'u32[]', space=smem, size = 0x4, offset = 0x4, fixed_abs, tag = 'smem constant byte address 0x4 - core index']
  #allocation1 [shape = 'u32[144,128]{1,0:T(1,128)}', space=vmem, size = 0x12000, scoped, tag = 'internal scratch']
  %s0 = inlined_call_operand.vmem [shape: f32[2,1024], index: 0, kind: input, shape index: {}]
  %s1 = inlined_call_operand.vmem [shape: f32[2,1024], index: 1, kind: output, shape index: {}]
  %s2 = sld [smem:[#allocation0]]
  $region14: #{identity_copy.1} parent=0
    _
  %s4 = ssub.s32 1, %s2
  %s5 = scalar_select 0, %s4, %s2
  // Predicated region
  $region2: #{identity_copy.1} parent=0 // pred_check
    _
  $region3: #{identity_copy.1} parent=0 // pred_check_branch
    %7 = sbr.rel (0) target = $region5
  $region4: #{identity_copy.1} parent=0 // pred_region
    _
  $region5: #{identity_copy.1} parent=0 // pred_fallthru
    _
  %v8 = vld [vmem:[%s0] sm:$0xff]
  %v9 = vld [vmem:[%s0 + $0x8] sm:$0xff]
  %10 = vst [vmem:[%s1] sm:$0xff] %v8
  %11 = vst [vmem:[%s1 + $0x8] sm:$0xff] %v9
  // Predicated region
  $region6: #{identity_copy.1} parent=0 // pred_check
    _
  $region7: #{identity_copy.1} parent=0 // pred_check_branch
    %13 = sbr.rel (0) target = $region9
  $region8: #{identity_copy.1} parent=0 // pred_region
    _
  $region9: #{identity_copy.1} parent=0 // pred_fallthru
    _
  // Predicated region
  $region10: #{identity_copy.1} parent=0 // pred_check
    _
  $region11: #{identity_copy.1} parent=0 // pred_check_branch
    %15 = sbr.rel (0) target = $region13
  $region12: #{identity_copy.1} parent=0 // pred_region
    _
  $region13: #{identity_copy.1} parent=0 // pred_fallthru
    _

</llo_original>
